<compile_context>
chip_gen: v7x
topology: tpu7x:2x2x1
jax: 0.10.0
libtpu: 0.0.40
codegen_flags: <defaults>
</compile_context>

<pallas_src>
import jax
import jax.numpy as jnp
from jax.experimental import pallas as pl
from jax.experimental.pallas import tpu as pltpu


def _round_up(x, m):
    return ((x + m - 1) // m) * m


def _cdiv(a, b):
    return (a + b - 1) // b


def tnn_kernel(tm_ref, w_ref, e_ref, out_ref):
    # tm_ref : (TM, tn)   tile of table_mapping (input dtype)
    # w_ref  : (1, tn)    full W, transposed, f32 (constant block, not refetched)
    # e_ref  : (TM, D)    tile of E
    # out_ref: (TM, D+1)  tile of E_f
    d = e_ref.shape[1]
    # Matvec on the VPU (broadcast multiply) + XLU (lane reduce), accumulated
    # in f32 regardless of input dtype (the PyTorch matmul is fp32).
    a = jnp.sum(tm_ref[...].astype(jnp.float32) * w_ref[...],
                axis=-1, keepdims=True)                      # (TM, 1) f32
    # Two direct stores instead of a concatenate: no (TM, D+1) temporary.
    out_ref[:, :d] = e_ref[...]
    out_ref[:, d:d + 1] = a.astype(out_ref.dtype)


def tnn_forward(E, table_mapping, W, *, row_tile=4096,
                vmem_budget_bytes=24 << 20, min_grid_steps=8):
    """E_f = concat([E, table_mapping @ W], axis=1) via a Pallas TPU kernel."""
    N, D = E.shape
    N2, tn = table_mapping.shape
    assert N2 == N, "E and table_mapping must have the same number of rows"
    assert W.shape == (tn, 1)
    dtype = E.dtype
    itemsize = jnp.dtype(dtype).itemsize
    # Sublane packing multiple: 8 for 32-bit dtypes, 16 for 16-bit, 32 for 8-bit.
    sublane = max(8, 32 // max(itemsize, 1))

    # --- VMEM-aware row-tile sizing (padded footprint) -----------------------
    # Each streamed block pads its last dim to 128 lanes and is double-buffered.
    padded_lanes = (_round_up(tn, 128) + _round_up(D, 128) + _round_up(D + 1, 128))
    bytes_per_row = padded_lanes * itemsize * 2  # x2 double buffering
    max_rows_for_budget = max(
        sublane, (vmem_budget_bytes // bytes_per_row) // sublane * sublane)

    tile = min(row_tile, max_rows_for_budget)
    tile = max(sublane, (tile // sublane) * sublane)
    # Keep enough grid steps for the "parallel" axis to shard across
    # TensorCores (v7x has 2 TCs); don't let one giant tile collapse the grid.
    if N > tile and _cdiv(N, tile) < min_grid_steps:
        tile = max(sublane, _round_up(_cdiv(N, min_grid_steps), sublane))
    tile = min(tile, _round_up(N, sublane))

    # --- pad the row dimension to a multiple of the tile ----------------------
    n_pad = _round_up(N, tile)
    if n_pad != N:
        pad = n_pad - N
        E_p = jnp.pad(E, ((0, pad), (0, 0)))
        tm_p = jnp.pad(table_mapping, ((0, pad), (0, 0)))
    else:
        E_p, tm_p = E, table_mapping

    w_row = W.reshape(1, tn).astype(jnp.float32)  # (1, tn), kept in f32

    grid = (n_pad // tile,)

    # Only raise the scoped-VMEM limit if the padded footprint actually needs it.
    footprint = tile * bytes_per_row + 2 * sublane * 128 * 4  # + tiny W block
    compiler_kwargs = dict(dimension_semantics=("parallel",))
    if footprint > (30 << 20):
        compiler_kwargs["vmem_limit_bytes"] = int(footprint * 5 // 4)

    out = pl.pallas_call(
        tnn_kernel,
        out_shape=jax.ShapeDtypeStruct((n_pad, D + 1), dtype),
        grid=grid,
        in_specs=[
            pl.BlockSpec((tile, tn), lambda i: (i, 0)),   # table_mapping tile
            pl.BlockSpec((1, tn), lambda i: (0, 0)),      # W row (constant block)
            pl.BlockSpec((tile, D), lambda i: (i, 0)),    # E tile
        ],
        out_specs=pl.BlockSpec((tile, D + 1), lambda i: (i, 0)),
        compiler_params=pltpu.CompilerParams(**compiler_kwargs),
    )(tm_p, w_row, E_p)

    return out[:N] if n_pad != N else out


if __name__ == "__main__":
    key = jax.random.PRNGKey(0)
    k_e, k_tm, k_w = jax.random.split(key, 3)

    # Small shapes consistent with the module: N rows of D-dim embeddings,
    # tn tables. N deliberately NOT a multiple of 8 to exercise padding.
    N, D, tn = 50, 7, 8

    E = jax.random.normal(k_e, (N, D), dtype=jnp.float32)
    # table_mapping is a (sparse) 0/1 assignment matrix in the original.
    table_ids = jax.random.randint(k_tm, (N,), 0, tn)
    table_mapping = jax.nn.one_hot(table_ids, tn, dtype=jnp.float32)
    # nn.Parameter(torch.randn(tn, 1)) -> deterministic random init in-script
    W = jax.random.normal(k_w, (tn, 1), dtype=jnp.float32)

    out = jax.block_until_ready(tnn_forward(E, table_mapping, W))
    ref = jnp.concatenate([E, table_mapping @ W], axis=1)
    assert out.shape == (N, D + 1)
    assert jnp.allclose(out, ref, atol=1e-5, rtol=1e-5), "mismatch vs reference"

    # Case 2: multi-step grid + remainder handling with a larger N and a
    # smaller forced row tile.
    N2 = 1030
    k_e2, k_tm2 = jax.random.split(jax.random.PRNGKey(1))
    E2 = jax.random.normal(k_e2, (N2, D), dtype=jnp.float32)
    tm2 = jax.nn.one_hot(
        jax.random.randint(k_tm2, (N2,), 0, tn), tn, dtype=jnp.float32)
    out2 = jax.block_until_ready(tnn_forward(E2, tm2, W, row_tile=128))
    ref2 = jnp.concatenate([E2, tm2 @ W], axis=1)
    assert out2.shape == (N2, D + 1)
    assert jnp.allclose(out2, ref2, atol=1e-5, rtol=1e-5), "mismatch (case 2)"

    # Case 3: bf16 inputs exercise the 16-sublane rounding and the f32
    # accumulation path (W stays f32 inside the kernel).
    N3 = 5000
    k_e3, k_tm3 = jax.random.split(jax.random.PRNGKey(2))
    E3 = jax.random.normal(k_e3, (N3, D), dtype=jnp.float32).astype(jnp.bfloat16)
    tm3 = jax.nn.one_hot(
        jax.random.randint(k_tm3, (N3,), 0, tn), tn, dtype=jnp.bfloat16)
    out3 = jax.block_until_ready(tnn_forward(E3, tm3, W))
    ref3 = jnp.concatenate(
        [E3.astype(jnp.float32), tm3.astype(jnp.float32) @ W], axis=1
    ).astype(jnp.bfloat16)
    assert out3.shape == (N3, D + 1)
    assert jnp.allclose(out3.astype(jnp.float32), ref3.astype(jnp.float32),
                        atol=1e-2, rtol=1e-2), "mismatch (case 3, bf16)"

    print("KERNEL_OK")
</pallas_src>

<mosaic_0001>
module attributes {stable_mosaic.version = 11 : i64} {
  func.func @tnn_kernel(%arg0: i32, %arg1: memref<56x8xf32, #tpu.memory_space<vmem>>, %arg2: memref<1x8xf32, #tpu.memory_space<vmem>>, %arg3: memref<56x7xf32, #tpu.memory_space<vmem>>, %arg4: memref<56x8xf32, #tpu.memory_space<vmem>>) attributes {dimension_semantics = [#tpu.dimension_semantics<parallel>], iteration_bounds = array<i64: 1>, scalar_prefetch = 0 : i64, scratch_operands = 0 : i64, tpu.core_type = #tpu.core_type<tc>, window_params = [{transform_indices = @transform_0, window_bounds = array<i64: 56, 8>}, {pipeline_mode = #tpu.pipeline_mode<synchronous>, transform_indices = @transform_1, window_bounds = array<i64: 1, 8>}, {transform_indices = @transform_2, window_bounds = array<i64: 56, 7>}, {transform_indices = @transform_3, window_bounds = array<i64: 56, 8>}]} {
    %c0 = arith.constant 0 : index
    %c0_0 = arith.constant 0 : index
    %0 = vector.load %arg1[%c0, %c0_0] : memref<56x8xf32, #tpu.memory_space<vmem>>, vector<56x8xf32>
    %c0_1 = arith.constant 0 : index
    %c0_2 = arith.constant 0 : index
    %1 = vector.load %arg2[%c0_1, %c0_2] : memref<1x8xf32, #tpu.memory_space<vmem>>, vector<1x8xf32>
    %2 = vector.broadcast %1 : vector<1x8xf32> to vector<56x8xf32>
    %3 = arith.mulf %0, %2 : vector<56x8xf32>
    %cst = arith.constant dense<0.000000e+00> : vector<56xf32>
    %4 = vector.multi_reduction <add>, %3, %cst [1] : vector<56x8xf32> to vector<56xf32>
    %5 = vector.shape_cast %4 : vector<56xf32> to vector<56x1xf32>
    %c0_3 = arith.constant 0 : index
    %c0_4 = arith.constant 0 : index
    %6 = vector.load %arg3[%c0_3, %c0_4] : memref<56x7xf32, #tpu.memory_space<vmem>>, vector<56x7xf32>
    %c0_5 = arith.constant 0 : index
    %c0_6 = arith.constant 0 : index
    %7 = vector.load %arg4[%c0_5, %c0_6] : memref<56x8xf32, #tpu.memory_space<vmem>>, vector<56x7xf32>
    tpu.vector_store %arg4[%c0_5, %c0_6], %6 {strides = array<i32>} : memref<56x8xf32, #tpu.memory_space<vmem>>, vector<56x7xf32>,
    %c0_7 = arith.constant 0 : index
    %c7 = arith.constant 7 : index
    %8 = vector.load %arg4[%c0_7, %c7] : memref<56x8xf32, #tpu.memory_space<vmem>>, vector<56x1xf32>
    tpu.vector_store %arg4[%c0_7, %c7], %5 {strides = array<i32>} : memref<56x8xf32, #tpu.memory_space<vmem>>, vector<56x1xf32>,
    return
  }
  func.func @transform_0(%arg0: i32) -> (i32, i32) {
    %c0_i32 = arith.constant 0 : i32
    %c0_i32_0 = arith.constant 0 : i32
    return %arg0, %c0_i32 : i32, i32
  }
  func.func @transform_1(%arg0: i32) -> (i32, i32) {
    %c0_i32 = arith.constant 0 : i32
    %c0_i32_0 = arith.constant 0 : i32
    %c0_i32_1 = arith.constant 0 : i32
    return %c0_i32, %c0_i32_0 : i32, i32
  }
  func.func @transform_2(%arg0: i32) -> (i32, i32) {
    %c0_i32 = arith.constant 0 : i32
    %c0_i32_0 = arith.constant 0 : i32
    return %arg0, %c0_i32 : i32, i32
  }
  func.func @transform_3(%arg0: i32) -> (i32, i32) {
    %c0_i32 = arith.constant 0 : i32
    %c0_i32_0 = arith.constant 0 : i32
    return %arg0, %c0_i32 : i32, i32
  }
}

</mosaic_0001>

<llo_original>
// kernel: tpu_custom_call.1
$region0: #{tpu_custom_call.1}
  #allocation0 [shape = 'u32[]', space=smem, size = 0x4, offset = 0x4, fixed_abs, tag = 'smem constant byte address 0x4 - core index']
  #allocation1 [shape = 'u32[144,128]{1,0:T(1,128)}', space=vmem, size = 0x12000, scoped, tag = 'internal scratch']
  %s0 = inlined_call_operand.vmem [shape: f32[56,8], index: 0, kind: input, shape index: {}]
  %s1 = inlined_call_operand.vmem [shape: f32[1,8], index: 1, kind: input, shape index: {}]
  %s2 = inlined_call_operand.vmem [shape: f32[56,7], index: 2, kind: input, shape index: {}]
  %s3 = inlined_call_operand.vmem [shape: f32[56,8], index: 3, kind: output, shape index: {}]
  %s4 = sld [smem:[#allocation0]]
  $region22: #{tpu_custom_call.1} parent=0
    _
  %s6 = ssub.s32 1, %s4
  %s7 = scalar_select 0, %s6, %s4
  // Predicated region
  $region2: #{tpu_custom_call.1} parent=0 // pred_check
    _
  $region3: #{tpu_custom_call.1} parent=0 // pred_check_branch
    %9 = sbr.rel (0) target = $region5
  $region4: #{tpu_custom_call.1} parent=0 // pred_region
    _
  $region5: #{tpu_custom_call.1} parent=0 // pred_fallthru
    _
  // Predicated region
  $region6: #{tpu_custom_call.1} parent=0 // pred_check
    _
  $region7: #{tpu_custom_call.1} parent=0 // pred_check_branch
    %11 = sbr.rel (0) target = $region9
  $region8: #{tpu_custom_call.1} parent=0 // pred_region
    _
  $region9: #{tpu_custom_call.1} parent=0 // pred_fallthru
    _
  // Predicated region
  $region10: #{tpu_custom_call.1} parent=0 // pred_check
    _
  $region11: #{tpu_custom_call.1} parent=0 // pred_check_branch
    %13 = sbr.rel (0) target = $region13
  $region12: #{tpu_custom_call.1} parent=0 // pred_region
    _
  $region13: #{tpu_custom_call.1} parent=0 // pred_fallthru
    _
  %v14 = vld [vmem:[%s0] sm:$0xff]
  %v15 = vld [vmem:[%s0 + $0x8] sm:$0xff]
  %v16 = vld [vmem:[%s0 + $0x10] sm:$0xff]
  %v17 = vld [vmem:[%s0 + $0x18] sm:$0xff]
  %v18 = vld [vmem:[%s0 + $0x20] sm:$0xff]
  %v19 = vld [vmem:[%s0 + $0x28] sm:$0xff]
  %v20 = vld [vmem:[%s0 + $0x30] sm:$0xff]
  %v21 = vld [vmem:[%s1] sm:$0x1]
  %v23 = vlaneseq
  %v24 = vshrl.u32 %v23, 7
  %v25 = vsub.s32 0, %v24
  %v26 = vrot.slane %v21, %v25
  %v28 = vmul.f32 %v14, %v26
  %v29 = vmul.f32 %v15, %v26
  %v30 = vmul.f32 %v16, %v26
  %v31 = vmul.f32 %v17, %v26
  %v32 = vmul.f32 %v18, %v26
  %v33 = vmul.f32 %v19, %v26
  %v34 = vmul.f32 %v20, %v26
  %vm35 = vcmask 64512
  %v36 = vsel %vm35, %v28, 0.0
  %37 = vadd.xlane.f32.xlu0 %v36
  %v38 = vpop.xlane.xlu0 %37
  %v39 = vsel %vm35, %v29, 0.0
  %40 = vadd.xlane.f32.xlu0 %v39
  %v41 = vpop.xlane.xlu0 %40
  %v42 = vsel %vm35, %v30, 0.0
  %43 = vadd.xlane.f32.xlu0 %v42
  %v44 = vpop.xlane.xlu0 %43
  %v45 = vsel %vm35, %v31, 0.0
  %46 = vadd.xlane.f32.xlu0 %v45
  %v47 = vpop.xlane.xlu0 %46
  %v48 = vsel %vm35, %v32, 0.0
  %49 = vadd.xlane.f32.xlu0 %v48
  %v50 = vpop.xlane.xlu0 %49
  %v51 = vsel %vm35, %v33, 0.0
  %52 = vadd.xlane.f32.xlu0 %v51
  %v53 = vpop.xlane.xlu0 %52
  %v54 = vsel %vm35, %v34, 0.0
  %55 = vadd.xlane.f32.xlu0 %v54
  %v56 = vpop.xlane.xlu0 %55
  %v57 = vld [vmem:[%s2] sm:$0xff]
  %v58 = vld [vmem:[%s2 + $0x8] sm:$0xff]
  %v59 = vld [vmem:[%s2 + $0x10] sm:$0xff]
  %v60 = vld [vmem:[%s2 + $0x18] sm:$0xff]
  %v61 = vld [vmem:[%s2 + $0x20] sm:$0xff]
  %v62 = vld [vmem:[%s2 + $0x28] sm:$0xff]
  %v63 = vld [vmem:[%s2 + $0x30] sm:$0xff]
  %vm64 = vcmask 56320
  %65 = vst.msk [vmem:[%s3] sm:$0xff] %vm64, %v57
  %66 = vst.msk [vmem:[%s3 + $0x8] sm:$0xff] %vm64, %v58
  %67 = vst.msk [vmem:[%s3 + $0x10] sm:$0xff] %vm64, %v59
  %68 = vst.msk [vmem:[%s3 + $0x18] sm:$0xff] %vm64, %v60
  %69 = vst.msk [vmem:[%s3 + $0x20] sm:$0xff] %vm64, %v61
  %70 = vst.msk [vmem:[%s3 + $0x28] sm:$0xff] %vm64, %v62
  %71 = vst.msk [vmem:[%s3 + $0x30] sm:$0xff] %vm64, %v63
  %vm72 = vcmask 64568
  %73 = vst.msk [vmem:[%s3] sm:$0xff] %vm72, %v38
  %74 = vst.msk [vmem:[%s3 + $0x8] sm:$0xff] %vm72, %v41
  %75 = vst.msk [vmem:[%s3 + $0x10] sm:$0xff] %vm72, %v44
  %76 = vst.msk [vmem:[%s3 + $0x18] sm:$0xff] %vm72, %v47
  %77 = vst.msk [vmem:[%s3 + $0x20] sm:$0xff] %vm72, %v50
  %78 = vst.msk [vmem:[%s3 + $0x28] sm:$0xff] %vm72, %v53
  %79 = vst.msk [vmem:[%s3 + $0x30] sm:$0xff] %vm72, %v56
  // Predicated region
  $region14: #{tpu_custom_call.1} parent=0 // pred_check
    _
  $region15: #{tpu_custom_call.1} parent=0 // pred_check_branch
    %81 = sbr.rel (0) target = $region17
  $region16: #{tpu_custom_call.1} parent=0 // pred_region
    _
  $region17: #{tpu_custom_call.1} parent=0 // pred_fallthru
    _
  // Predicated region
  $region18: #{tpu_custom_call.1} parent=0 // pred_check
    _
  $region19: #{tpu_custom_call.1} parent=0 // pred_check_branch
    %83 = sbr.rel (0) target = $region21
  $region20: #{tpu_custom_call.1} parent=0 // pred_region
    _
  $region21: #{tpu_custom_call.1} parent=0 // pred_fallthru
    _

</llo_original>
